<compile_context>
chip_gen: v7x
topology: tpu7x:2x2x1
jax: 0.10.0
libtpu: 0.0.40
codegen_flags: <defaults>
</compile_context>

<pallas_src>
import functools

import jax
import jax.numpy as jnp
from jax import lax
from jax.experimental import pallas as pl
from jax.experimental.pallas import tpu as pltpu

_OUT_SUB = 8     # sublane-dense rows of the per-tile partial-sum output block
_OUT_LANE = 128  # lane-dense cols of the per-tile partial-sum output block


def _label_smoothing_kernel(pred_ref, tgt_ref, out_ref, *,
                            num_classes, smoothing, total_n, tile_n):
    """One row-tile of the label-smoothed NLL.

    pred_ref: (tile_n, C) VMEM, tgt_ref: (tile_n, 1) int32 VMEM,
    out_ref:  (8, 128) VMEM per-tile partial-sum slab (scalar broadcast, unmasked store).
    """
    confidence = jnp.float32(1.0 - smoothing)
    smooth_val = jnp.float32(smoothing / (num_classes - 1))

    p = pred_ref[...].astype(jnp.float32)                          # (TN, C)
    tn, c = p.shape

    # numerically-stable log-softmax pieces; logp / true_dist never materialized
    m = jnp.max(p, axis=-1, keepdims=True)                         # (TN, 1)
    z = p - m                                                      # (TN, C)
    lse = jnp.log(jnp.sum(jnp.exp(z), axis=-1, keepdims=True))     # (TN, 1)
    sum_z = jnp.sum(z, axis=-1, keepdims=True)                     # (TN, 1)

    cls_ids = lax.broadcasted_iota(jnp.int32, (tn, c), 1)
    z_tgt = jnp.sum(jnp.where(cls_ids == tgt_ref[...], z, 0.0),
                    axis=-1, keepdims=True)                        # (TN, 1) = z[target]

    # sum_c(true_dist * logp) = smooth*(sum_z - C*lse) + (conf - smooth)*(z_tgt - lse)
    per_row = (-smooth_val) * (sum_z - jnp.float32(c) * lse) \
              - (confidence - smooth_val) * (z_tgt - lse)          # (TN, 1)

    # mask tail rows of a possibly-partial last tile (padded data is garbage)
    row_ids = lax.broadcasted_iota(jnp.int32, (tn, 1), 0) + pl.program_id(0) * tile_n
    per_row = jnp.where(row_ids < total_n, per_row, 0.0)

    partial = jnp.sum(per_row)
    out_ref[...] = jnp.full((_OUT_SUB, _OUT_LANE), partial, dtype=jnp.float32)


def label_smoothing_loss(pred, target, *, classes, smoothing=0.0, tile_n=512):
    """pred: (N, C) float (f32 or bf16; math done in f32); target: (N,) int.

    Returns scalar float32 loss matching the PyTorch LabelSmoothingLoss forward.
    """
    n, c = pred.shape
    assert c == classes
    tgt2d = target.astype(jnp.int32).reshape(n, 1)

    # Row-tile sizing: multiple of 8; capped so double-buffered pred tiles plus f32
    # intermediates stay comfortably inside v7x's 64 MiB VMEM (and under the scoped limit).
    budget_per_buf = 4 * 1024 * 1024                                # bytes per pred tile
    cap = max(8, (budget_per_buf // (c * 4)) // 8 * 8)
    tn = int(min(tile_n, cap, max(8, ((n + 7) // 8) * 8)))
    num_tiles = pl.cdiv(n, tn)

    kernel = functools.partial(
        _label_smoothing_kernel,
        num_classes=classes, smoothing=float(smoothing), total_n=n, tile_n=tn,
    )

    out = pl.pallas_call(
        kernel,
        out_shape=jax.ShapeDtypeStruct((num_tiles * _OUT_SUB, _OUT_LANE), jnp.float32),
        grid=(num_tiles,),
        in_specs=[
            pl.BlockSpec((tn, c), lambda i: (i, 0)),
            pl.BlockSpec((tn, 1), lambda i: (i, 0)),
        ],
        out_specs=pl.BlockSpec((_OUT_SUB, _OUT_LANE), lambda i: (i, 0)),
        compiler_params=pltpu.CompilerParams(
            dimension_semantics=("parallel",),     # shards row tiles across TCs on v7x
            vmem_limit_bytes=48 * 1024 * 1024,
        ),
    )(pred, tgt2d)

    # TODO(synk): for vocab-scale C (>32K) add a second grid axis over classes with an
    # online (streaming) logsumexp instead of a full (tn, C) row block.
    partials = out.reshape(num_tiles, _OUT_SUB, _OUT_LANE)[:, 0, 0]   # one scalar per tile
    return jnp.sum(partials) / jnp.float32(n)


def _reference(pred, target, classes, smoothing):
    # plain-JAX reference matching the PyTorch module semantics
    logp = jax.nn.log_softmax(pred.astype(jnp.float32), axis=-1)
    confidence = 1.0 - smoothing
    true_dist = jnp.full_like(logp, smoothing / (classes - 1))
    true_dist = true_dist.at[jnp.arange(pred.shape[0]), target].set(confidence)
    return jnp.mean(jnp.sum(-true_dist * logp, axis=-1))


if __name__ == "__main__":
    key = jax.random.PRNGKey(0)
    smoothing = 0.1
    k1, k2, k3, k4 = jax.random.split(key, 4)

    # case 1: small, single tile
    N1, C1 = 8, 32
    pred1 = jax.random.normal(k1, (N1, C1), dtype=jnp.float32)
    tgt1 = jax.random.randint(k2, (N1,), 0, C1, dtype=jnp.int32)
    loss1 = jax.block_until_ready(
        label_smoothing_loss(pred1, tgt1, classes=C1, smoothing=smoothing))
    ref1 = _reference(pred1, tgt1, C1, smoothing)
    assert jnp.allclose(loss1, ref1, atol=1e-4, rtol=1e-5), (loss1, ref1)

    # case 2: multi-tile, parallel grid axis, partial (masked) last tile
    N2, C2 = 50, 128
    pred2 = jax.random.normal(k3, (N2, C2), dtype=jnp.float32)
    tgt2 = jax.random.randint(k4, (N2,), 0, C2, dtype=jnp.int32)
    loss2 = jax.block_until_ready(
        label_smoothing_loss(pred2, tgt2, classes=C2, smoothing=smoothing, tile_n=16))
    ref2 = _reference(pred2, tgt2, C2, smoothing)
    assert jnp.allclose(loss2, ref2, atol=1e-4, rtol=1e-5), (loss2, ref2)

    print("KERNEL_OK")
</pallas_src>

<mosaic_0001>
module attributes {stable_mosaic.version = 11 : i64} {
  func.func @_label_smoothing_kernel(%arg0: i32, %arg1: memref<8x32xf32, #tpu.memory_space<vmem>>, %arg2: memref<8x1xi32, #tpu.memory_space<vmem>>, %arg3: memref<8x128xf32, #tpu.memory_space<vmem>>) attributes {dimension_semantics = [#tpu.dimension_semantics<parallel>], iteration_bounds = array<i64: 1>, scalar_prefetch = 0 : i64, scratch_operands = 0 : i64, tpu.core_type = #tpu.core_type<tc>, window_params = [{transform_indices = @transform_0, window_bounds = array<i64: 8, 32>}, {transform_indices = @transform_1, window_bounds = array<i64: 8, 1>}, {transform_indices = @transform_2, window_bounds = array<i64: 8, 128>}]} {
    %c0 = arith.constant 0 : index
    %c0_0 = arith.constant 0 : index
    %0 = vector.load %arg1[%c0, %c0_0] : memref<8x32xf32, #tpu.memory_space<vmem>>, vector<8x32xf32>
    %cst = arith.constant dense<0xFF800000> : vector<8xf32>
    %1 = vector.multi_reduction <maximumf>, %0, %cst [1] : vector<8x32xf32> to vector<8xf32>
    %2 = vector.shape_cast %1 : vector<8xf32> to vector<8x1xf32>
    %3 = vector.broadcast %2 : vector<8x1xf32> to vector<8x32xf32>
    %4 = arith.subf %0, %3 : vector<8x32xf32>
    %5 = math.exp %4 : vector<8x32xf32>
    %cst_1 = arith.constant dense<0.000000e+00> : vector<8xf32>
    %6 = vector.multi_reduction <add>, %5, %cst_1 [1] : vector<8x32xf32> to vector<8xf32>
    %7 = vector.shape_cast %6 : vector<8xf32> to vector<8x1xf32>
    %8 = math.log %7 : vector<8x1xf32>
    %cst_2 = arith.constant dense<0.000000e+00> : vector<8xf32>
    %9 = vector.multi_reduction <add>, %4, %cst_2 [1] : vector<8x32xf32> to vector<8xf32>
    %10 = vector.shape_cast %9 : vector<8xf32> to vector<8x1xf32>
    %11 = tpu.iota {dimensions = array<i32: 1>} : vector<8x32xi32>
    %c0_3 = arith.constant 0 : index
    %c0_4 = arith.constant 0 : index
    %12 = vector.load %arg2[%c0_3, %c0_4] : memref<8x1xi32, #tpu.memory_space<vmem>>, vector<8x1xi32>
    %13 = vector.broadcast %12 : vector<8x1xi32> to vector<8x32xi32>
    %14 = arith.cmpi eq, %11, %13 : vector<8x32xi32>
    %cst_5 = arith.constant 0.000000e+00 : f32
    %15 = vector.broadcast %cst_5 : f32 to vector<8x32xf32>
    %16 = arith.select %14, %4, %15 : vector<8x32xi1>, vector<8x32xf32>
    %cst_6 = arith.constant dense<0.000000e+00> : vector<8xf32>
    %17 = vector.multi_reduction <add>, %16, %cst_6 [1] : vector<8x32xf32> to vector<8xf32>
    %18 = vector.shape_cast %17 : vector<8xf32> to vector<8x1xf32>
    %cst_7 = arith.constant 0.000000e+00 : f32
    %cst_8 = arith.constant 0.0032258064 : f32
    %19 = arith.subf %cst_7, %cst_8 : f32
    %cst_9 = arith.constant 3.200000e+01 : f32
    %20 = vector.broadcast %cst_9 : f32 to vector<8x1xf32>
    %21 = arith.mulf %20, %8 : vector<8x1xf32>
    %22 = arith.subf %10, %21 : vector<8x1xf32>
    %23 = vector.broadcast %19 : f32 to vector<8x1xf32>
    %24 = arith.mulf %23, %22 : vector<8x1xf32>
    %cst_10 = arith.constant 0.899999976 : f32
    %cst_11 = arith.constant 0.0032258064 : f32
    %25 = arith.subf %cst_10, %cst_11 : f32
    %26 = arith.subf %18, %8 : vector<8x1xf32>
    %27 = vector.broadcast %25 : f32 to vector<8x1xf32>
    %28 = arith.mulf %27, %26 : vector<8x1xf32>
    %29 = arith.subf %24, %28 : vector<8x1xf32>
    %30 = tpu.iota {dimensions = array<i32: 0>} : vector<8x1xi32>
    %c8_i32 = arith.constant 8 : i32
    %31 = arith.muli %arg0, %c8_i32 : i32
    %32 = vector.broadcast %31 : i32 to vector<8x1xi32>
    %33 = arith.addi %30, %32 : vector<8x1xi32>
    %c8_i32_12 = arith.constant 8 : i32
    %34 = vector.broadcast %c8_i32_12 : i32 to vector<8x1xi32>
    %35 = arith.cmpi slt, %33, %34 : vector<8x1xi32>
    %cst_13 = arith.constant 0.000000e+00 : f32
    %36 = vector.broadcast %cst_13 : f32 to vector<8x1xf32>
    %37 = arith.select %35, %29, %36 : vector<8x1xi1>, vector<8x1xf32>
    %38 = vector.shape_cast %37 : vector<8x1xf32> to vector<1x8x1xf32>
    %cst_14 = arith.constant dense<0.000000e+00> : vector<1xf32>
    %39 = vector.multi_reduction <add>, %38, %cst_14 [1, 2] : vector<1x8x1xf32> to vector<1xf32>
    %40 = vector.shape_cast %39 : vector<1xf32> to vector<1x1x1xf32>
    %41 = vector.extract %40[0, 0, 0] : f32 from vector<1x1x1xf32>
    %42 = vector.broadcast %41 : f32 to vector<8x128xf32>
    %c0_15 = arith.constant 0 : index
    %c0_16 = arith.constant 0 : index
    %43 = vector.load %arg3[%c0_15, %c0_16] : memref<8x128xf32, #tpu.memory_space<vmem>>, vector<8x128xf32>
    tpu.vector_store %arg3[%c0_15, %c0_16], %42 {strides = array<i32>} : memref<8x128xf32, #tpu.memory_space<vmem>>, vector<8x128xf32>,
    return
  }
  func.func @transform_0(%arg0: i32) -> (i32, i32) {
    %c0_i32 = arith.constant 0 : i32
    %c0_i32_0 = arith.constant 0 : i32
    return %arg0, %c0_i32 : i32, i32
  }
  func.func @transform_1(%arg0: i32) -> (i32, i32) {
    %c0_i32 = arith.constant 0 : i32
    %c0_i32_0 = arith.constant 0 : i32
    return %arg0, %c0_i32 : i32, i32
  }
  func.func @transform_2(%arg0: i32) -> (i32, i32) {
    %c0_i32 = arith.constant 0 : i32
    %c0_i32_0 = arith.constant 0 : i32
    return %arg0, %c0_i32 : i32, i32
  }
}

</mosaic_0001>

<llo_original>
// kernel: tpu_custom_call.1
$region0: #{tpu_custom_call.1}
  #allocation0 [shape = 'u32[]', space=smem, size = 0x4, offset = 0x4, fixed_abs, tag = 'smem constant byte address 0x4 - core index']
  #allocation1 [shape = 'u32[144,128]{1,0:T(1,128)}', space=vmem, size = 0x12000, scoped, tag = 'internal scratch']
  %s0 = inlined_call_operand.vmem [shape: f32[8,32], index: 0, kind: input, shape index: {}]
  %s1 = inlined_call_operand.vmem [shape: s32[8,1], index: 1, kind: input, shape index: {}]
  %s2 = inlined_call_operand.hbm [shape: f32[8,128], index: 2, kind: output, shape index: {}]
  %s3 = sld [smem:[#allocation0]]
  $region18: #{tpu_custom_call.1} parent=0
    _
  %s5 = ssub.s32 1, %s3
  %s6 = scalar_select 0, %s5, %s3
  $region1: #{tpu_custom_call.1} parent=0
    #allocation2 [shape = 'u8[4096]{0}', space=vmem, size = 0x1000, scoped, tag = 'output window, operand 0, single buffered']
    #allocation3 [shape = 's32[1]{0}', space=sflag, size = 0x4, scoped, tag = 'scoped memory for tpu_custom_call.1']
    %7 = vsyncpa [#allocation3], 0
    // Predicated region
    $region2: #{tpu_custom_call.1} parent=1 // pred_check
      _
    $region3: #{tpu_custom_call.1} parent=1 // pred_check_branch
      %9 = sbr.rel (0) target = $region5
    $region4: #{tpu_custom_call.1} parent=1 // pred_region
      _
    $region5: #{tpu_custom_call.1} parent=1 // pred_fallthru
      _
    // Predicated region
    $region6: #{tpu_custom_call.1} parent=1 // pred_check
      _
    $region7: #{tpu_custom_call.1} parent=1 // pred_check_branch
      %11 = sbr.rel (0) target = $region9
    $region8: #{tpu_custom_call.1} parent=1 // pred_region
      _
    $region9: #{tpu_custom_call.1} parent=1 // pred_fallthru
      _
    %v12 = vld [vmem:[%s0] sm:$0xff]
    %vm13 = vcmask 261120
    %v14 = vsel %vm13, %v12, -inf
    %15 = vmax.xlane.f32.xlu0 %v14
    %v16 = vpop.xlane.xlu0 %15
    %v17 = vsub.f32 %v12, %v16
    %v18 = vmul.f32 %v17, 1.442695
    %v19 = vpow.pop %v18
    %v20 = vsel %vm13, %v19, 0.0
    %21 = vadd.xlane.f32.xlu0 %v20
    %v22 = vpop.xlane.xlu0 %21
    %v23 = vlog2.pop %v22
    %v24 = vmul.f32 %v23, 0.6931472
    %v25 = vsel %vm13, %v17, 0.0
    %26 = vadd.xlane.f32.xlu0 %v25
    %v27 = vpop.xlane.xlu0 %26
    %v28 = vlaneseq
    %v29 = vand.u32 %v28, 127
    %v30 = vld [vmem:[%s1] sm:$0xff]
    %31 = vset.pattern.permute.xlu0 0
    %32 = vperm.xlu0 %31, %v30
    %v33 = vpop.permute.xlu0 %32
    %vm34 = vcmp.eq.s32.totalorder %v29, %v33
    %v35 = vsel %vm34, %v17, 0.0
    %v36 = vsel %vm13, %v35, 0.0
    %37 = vadd.xlane.f32.xlu0 %v36
    %v38 = vpop.xlane.xlu0 %37
    %v39 = vmul.f32 %v24, 32.0
    %v40 = vsub.f32 %v27, %v39
    %v41 = vmul.f32 %v40, -0.0032258064
    %v42 = vsub.f32 %v38, %v24
    %v43 = vmul.f32 %v42, 0.8967742
    %v44 = vsub.f32 %v41, %v43
    %v45 = vlaneseq
    %v46 = vshrl.u32 %v45, 7
    %s47 = smul.u32 0, 8
    %v48 = vstv %s47
    %v49 = vadd.s32 %v46, %v48
    %vm50 = vcmp.lt.s32.totalorder %v49, 8
    %v51 = vsel %vm50, %v44, 0.0
    %vm52 = vcmask 7168
    %v53 = vsel %vm52, %v51, 0.0
    %54 = vadd.xlane.f32.xlu0 %v53
    %v55 = vpop.xlane.xlu0 %54
    %v56 = vrot.slane %v55, 4
    %v57 = vadd.f32 %v55, %v56
    %v58 = vrot.slane %v57, 2
    %v59 = vadd.f32 %v57, %v58
    %v60 = vrot.slane %v59, 1
    %v61 = vadd.f32 %v59, %v60
    %s62 = vtos %v61
    %v63 = vstv %s62
    %64 = vst [vmem:[#allocation2] sm:$0xff] %v63
    // Predicated region
    $region10: #{tpu_custom_call.1} parent=1 // pred_check
      _
    $region11: #{tpu_custom_call.1} parent=1 // pred_check_branch
      %66 = sbr.rel (0) target = $region13
    $region12: #{tpu_custom_call.1} parent=1 // pred_region
      %s68 = ssub.s32 128, 128
      %69 = vsyncadd [#allocation3], %s68
      %s71 = sshll.u32 [#allocation2], 4
      %s72 = int_to_ptr.vmem [resolvable:$true] %s71
      %74 = dma.vmem_to_hbm [thread:$0]  %s72, 128, %s2, [#allocation3]
    $region13: #{tpu_custom_call.1} parent=1 // pred_fallthru
      _
    // Predicated region
    $region14: #{tpu_custom_call.1} parent=1 // pred_check
      _
    $region15: #{tpu_custom_call.1} parent=1 // pred_check_branch
      %76 = sbr.rel (0) target = $region17
    $region16: #{tpu_custom_call.1} parent=1 // pred_region
      %77 = dma.done [#allocation3], 128
    $region17: #{tpu_custom_call.1} parent=1 // pred_fallthru
      _
    %78 = vsyncpa [#allocation3], 1

</llo_original>
